<compile_context>
chip_gen: v7x
topology: tpu7x:2x2x1
jax: 0.10.0
libtpu: 0.0.40
codegen_flags: <defaults>
</compile_context>

<pallas_src>
import jax
import jax.numpy as jnp
from jax import lax
from jax.experimental import pallas as pl
from jax.experimental.pallas import tpu as pltpu


def _round_up(x, m):
    return ((x + m - 1) // m) * m


def cbow_kernel(x_ref, w1_ref, w2_ref, out_ref):
    # Mean first (linear op): (N, V) -> (1, V), cheap VPU sublane reduction.
    avg_x = jnp.mean(x_ref[...], axis=0, keepdims=True)           # (1, V)

    # h = avg_x @ W1^T directly on the original (E, V) layout; the MXU handles
    # the transposed contraction natively (no materialized transpose).
    h = lax.dot_general(
        avg_x, w1_ref[...],
        dimension_numbers=(((1,), (1,)), ((), ())),
        preferred_element_type=jnp.float32)                        # (1, E)

    # out_tile = h @ W2_tile^T on the original (TV, E) layout; output is
    # lane-dense (1, TV).
    out_ref[...] = lax.dot_general(
        h, w2_ref[...],
        dimension_numbers=(((1,), (1,)), ((), ())),
        preferred_element_type=jnp.float32).astype(out_ref.dtype)  # (1, TV)


def cbow_forward(x, w1, w2, *, tv=512):
    """CBOW forward.

    x : (N, V)  context rows (dense; one-hot rows in the word2vec use case)
    w1: (E, V)  input_to_hidden.weight   (nn.Linear layout, no transpose done)
    w2: (V, E)  hidden_to_output.weight  (nn.Linear layout, no transpose done)
    returns (1, V) float32, matching torch's (1, voc_size).
    """
    N, V = x.shape
    E, _ = w1.shape

    # Lane-dense output: pad vocab axis to a multiple of 128 (and of the V
    # tile) so stores are unmasked; zero padding is mathematically inert and
    # sliced off afterwards. For V already aligned, the pads/slice are no-ops.
    if V <= tv:
        v_pad = _round_up(V, 128)
        tv = v_pad
    else:
        v_pad = _round_up(V, tv)
    if v_pad != V:
        pad = v_pad - V
        x = jnp.pad(x, ((0, 0), (0, pad)))
        w1 = jnp.pad(w1, ((0, 0), (0, pad)))
        w2 = jnp.pad(w2, ((0, pad), (0, 0)))

    num_tiles = v_pad // tv

    cost = pl.CostEstimate(
        flops=int(N * v_pad + 2 * E * v_pad * (1 + num_tiles)),
        transcendentals=0,
        bytes_accessed=int(4 * (N * v_pad + 2 * E * v_pad + v_pad)),
    )

    out = pl.pallas_call(
        cbow_kernel,
        out_shape=jax.ShapeDtypeStruct((1, v_pad), jnp.float32),
        grid=(num_tiles,),
        in_specs=[
            pl.BlockSpec((N, v_pad), lambda i: (0, 0)),   # x : resident across tiles
            pl.BlockSpec((E, v_pad), lambda i: (0, 0)),   # w1: resident across tiles
            pl.BlockSpec((tv, E), lambda i: (i, 0)),      # w2: streamed per V tile
        ],
        out_specs=pl.BlockSpec((1, tv), lambda i: (0, i)),
        compiler_params=pltpu.CompilerParams(
            dimension_semantics=("parallel",),            # V tiles are independent
        ),
        cost_estimate=cost,
    )(x, w1, w2)

    return out[:, :V]


def cbow_reference(x, w1, w2):
    emb = x @ w1.T
    avg = jnp.mean(emb, axis=0)
    return avg[None, :] @ w2.T


if __name__ == "__main__":
    voc_size = 16        # vocabulary size
    embedding_size = 2   # matches module default
    context = 8          # number of context rows (dim reduced by mean)

    key = jax.random.PRNGKey(0)
    k_x, k_w1, k_w2 = jax.random.split(key, 3)

    # Deterministic one-hot context input (N, V).
    idx = jax.random.randint(k_x, (context,), 0, voc_size)
    x = jax.nn.one_hot(idx, voc_size, dtype=jnp.float32)                   # (8, 16)

    # Deterministic parameter init (shapes per nn.Linear: (out, in)).
    w1 = jax.random.normal(k_w1, (embedding_size, voc_size), jnp.float32)  # (2, 16)
    w2 = jax.random.normal(k_w2, (voc_size, embedding_size), jnp.float32)  # (16, 2)

    out = jax.block_until_ready(cbow_forward(x, w1, w2))
    ref = cbow_reference(x, w1, w2)

    assert out.shape == (1, voc_size)
    assert jnp.allclose(out, ref, atol=1e-5, rtol=1e-4), "mismatch vs reference"

    print("KERNEL_OK")
</pallas_src>

<mosaic_0001>
module attributes {stable_mosaic.version = 11 : i64} {
  func.func @cbow_kernel(%arg0: i32, %arg1: memref<8x128xf32, #tpu.memory_space<vmem>>, %arg2: memref<2x128xf32, #tpu.memory_space<vmem>>, %arg3: memref<128x2xf32, #tpu.memory_space<vmem>>, %arg4: memref<1x128xf32, #tpu.memory_space<vmem>>) attributes {dimension_semantics = [#tpu.dimension_semantics<parallel>], iteration_bounds = array<i64: 1>, scalar_prefetch = 0 : i64, scratch_operands = 0 : i64, tpu.core_type = #tpu.core_type<tc>, window_params = [{pipeline_mode = #tpu.pipeline_mode<synchronous>, transform_indices = @transform_0, window_bounds = array<i64: 8, 128>}, {pipeline_mode = #tpu.pipeline_mode<synchronous>, transform_indices = @transform_1, window_bounds = array<i64: 2, 128>}, {transform_indices = @transform_2, window_bounds = array<i64: 128, 2>}, {transform_indices = @transform_3, window_bounds = array<i64: 1, 128>}]} {
    %c0 = arith.constant 0 : index
    %c0_0 = arith.constant 0 : index
    %0 = vector.load %arg1[%c0, %c0_0] : memref<8x128xf32, #tpu.memory_space<vmem>>, vector<8x128xf32>
    %cst = arith.constant dense<0.000000e+00> : vector<128xf32>
    %1 = vector.multi_reduction <add>, %0, %cst [0] : vector<8x128xf32> to vector<128xf32>
    %2 = vector.shape_cast %1 : vector<128xf32> to vector<1x128xf32>
    %cst_1 = arith.constant 8.000000e+00 : f32
    %3 = vector.broadcast %cst_1 : f32 to vector<1x128xf32>
    %4 = arith.divf %2, %3 : vector<1x128xf32>
    %c0_2 = arith.constant 0 : index
    %c0_3 = arith.constant 0 : index
    %5 = vector.load %arg2[%c0_2, %c0_3] : memref<2x128xf32, #tpu.memory_space<vmem>>, vector<2x128xf32>
    %cst_4 = arith.constant dense<0.000000e+00> : vector<1x2xf32>
    %6 = tpu.matmul %4, %5, %cst_4 {dimension_numbers = #tpu.dot_dimension_numbers<[1], [1], [0], [0], [0, 0, 1, 0], [], []>} : vector<1x128xf32>, vector<2x128xf32>, vector<1x2xf32> -> vector<1x2xf32>
    %c0_5 = arith.constant 0 : index
    %c0_6 = arith.constant 0 : index
    %7 = vector.load %arg3[%c0_5, %c0_6] : memref<128x2xf32, #tpu.memory_space<vmem>>, vector<128x2xf32>
    %cst_7 = arith.constant dense<0.000000e+00> : vector<1x128xf32>
    %8 = tpu.matmul %6, %7, %cst_7 {dimension_numbers = #tpu.dot_dimension_numbers<[1], [1], [0], [0], [0, 0, 1, 0], [], []>} : vector<1x2xf32>, vector<128x2xf32>, vector<1x128xf32> -> vector<1x128xf32>
    %c0_8 = arith.constant 0 : index
    %c0_9 = arith.constant 0 : index
    %9 = vector.load %arg4[%c0_8, %c0_9] : memref<1x128xf32, #tpu.memory_space<vmem>>, vector<1x128xf32>
    tpu.vector_store %arg4[%c0_8, %c0_9], %8 {strides = array<i32>} : memref<1x128xf32, #tpu.memory_space<vmem>>, vector<1x128xf32>,
    return
  }
  func.func @transform_0(%arg0: i32) -> (i32, i32) {
    %c0_i32 = arith.constant 0 : i32
    %c0_i32_0 = arith.constant 0 : i32
    %c0_i32_1 = arith.constant 0 : i32
    return %c0_i32, %c0_i32_0 : i32, i32
  }
  func.func @transform_1(%arg0: i32) -> (i32, i32) {
    %c0_i32 = arith.constant 0 : i32
    %c0_i32_0 = arith.constant 0 : i32
    %c0_i32_1 = arith.constant 0 : i32
    return %c0_i32, %c0_i32_0 : i32, i32
  }
  func.func @transform_2(%arg0: i32) -> (i32, i32) {
    %c0_i32 = arith.constant 0 : i32
    %c0_i32_0 = arith.constant 0 : i32
    return %arg0, %c0_i32 : i32, i32
  }
  func.func @transform_3(%arg0: i32) -> (i32, i32) {
    %c0_i32 = arith.constant 0 : i32
    %c0_i32_0 = arith.constant 0 : i32
    return %c0_i32, %arg0 : i32, i32
  }
}

</mosaic_0001>

<llo_original>
// kernel: tpu_custom_call.1
$region0: #{tpu_custom_call.1}
  #allocation0 [shape = 'u32[]', space=smem, size = 0x4, offset = 0x4, fixed_abs, tag = 'smem constant byte address 0x4 - core index']
  #allocation1 [shape = 'u32[144,128]{1,0:T(1,128)}', space=vmem, size = 0x12000, scoped, tag = 'internal scratch']
  %s0 = inlined_call_operand.vmem [shape: f32[8,128], index: 0, kind: input, shape index: {}]
  %s1 = inlined_call_operand.vmem [shape: f32[2,128], index: 1, kind: input, shape index: {}]
  %s2 = inlined_call_operand.vmem [shape: f32[128,2], index: 2, kind: input, shape index: {}]
  %s3 = inlined_call_operand.hbm [shape: f32[1,128], index: 3, kind: output, shape index: {}]
  %s4 = sld [smem:[#allocation0]]
  $region22: #{tpu_custom_call.1} parent=0
    _
  %s6 = ssub.s32 1, %s4
  %s7 = scalar_select 0, %s6, %s4
  $region1: #{tpu_custom_call.1} parent=0
    #allocation2 [shape = 'u8[512]{0}', space=vmem, size = 0x400, scoped, tag = 'output window, operand 0, single buffered']
    #allocation3 [shape = 's32[1]{0}', space=sflag, size = 0x4, scoped, tag = 'scoped memory for tpu_custom_call.1']
    %8 = vsyncpa [#allocation3], 0
    // Predicated region
    $region2: #{tpu_custom_call.1} parent=1 // pred_check
      _
    $region3: #{tpu_custom_call.1} parent=1 // pred_check_branch
      %10 = sbr.rel (0) target = $region5
    $region4: #{tpu_custom_call.1} parent=1 // pred_region
      _
    $region5: #{tpu_custom_call.1} parent=1 // pred_fallthru
      _
    // Predicated region
    $region6: #{tpu_custom_call.1} parent=1 // pred_check
      _
    $region7: #{tpu_custom_call.1} parent=1 // pred_check_branch
      %12 = sbr.rel (0) target = $region9
    $region8: #{tpu_custom_call.1} parent=1 // pred_region
      _
    $region9: #{tpu_custom_call.1} parent=1 // pred_fallthru
      _
    // Predicated region
    $region10: #{tpu_custom_call.1} parent=1 // pred_check
      _
    $region11: #{tpu_custom_call.1} parent=1 // pred_check_branch
      %14 = sbr.rel (0) target = $region13
    $region12: #{tpu_custom_call.1} parent=1 // pred_region
      _
    $region13: #{tpu_custom_call.1} parent=1 // pred_fallthru
      _
    %v15 = vld [vmem:[%s0] sm:$0xff]
    %v16 = vrot.slane %v15, 4
    %v17 = vadd.f32 %v15, %v16
    %v18 = vrot.slane %v17, 2
    %v19 = vadd.f32 %v17, %v18
    %v20 = vrot.slane %v19, 1
    %v21 = vadd.f32 %v19, %v20
    %v22 = vrcp.pop 8.0
    %v23 = vmul.f32 %v21, %v22
    %v24 = vld [vmem:[%s1] sm:$0x3]
    %25 = vmatprep.subr.mxu0 0.0
    %26 = vmatpush1.xpose.msra.mxu0 %v24
    %27 = vmatprep.subr.mxu0 0.0
    %28 = vmatpush1.xpose.msra.mxu0 0.0
    %29 = vmatprep.subr.mxu0 0.0
    %30 = vmatpush1.xpose.msra.mxu0 0.0
    %31 = vmatprep.subr.mxu0 0.0
    %32 = vmatpush1.xpose.msra.mxu0 0.0
    %33 = vmatprep.subr.mxu0 0.0
    %34 = vmatpush1.xpose.msra.mxu0 0.0
    %35 = vmatprep.subr.mxu0 0.0
    %36 = vmatpush1.xpose.msra.mxu0 0.0
    %37 = vmatprep.subr.mxu0 0.0
    %38 = vmatpush1.xpose.msra.mxu0 0.0
    %39 = vmatprep.subr.mxu0 0.0
    %40 = vmatpush1.xpose.msra.mxu0 0.0
    %41 = vmatprep.subr.mxu0 0.0
    %42 = vmatpush1.xpose.msra.mxu0 0.0
    %43 = vmatprep.subr.mxu0 0.0
    %44 = vmatpush1.xpose.msra.mxu0 0.0
    %45 = vmatprep.subr.mxu0 0.0
    %46 = vmatpush1.xpose.msra.mxu0 0.0
    %47 = vmatprep.subr.mxu0 0.0
    %48 = vmatpush1.xpose.msra.mxu0 0.0
    %49 = vmatprep.subr.mxu0 0.0
    %50 = vmatpush1.xpose.msra.mxu0 0.0
    %51 = vmatprep.subr.mxu0 0.0
    %52 = vmatpush1.xpose.msra.mxu0 0.0
    %53 = vmatprep.subr.mxu0 0.0
    %54 = vmatpush1.xpose.msra.mxu0 0.0
    %55 = vmatprep.subr.mxu0 0.0
    %56 = vmatpush1.xpose.msra.mxu0 0.0
    %57 = vmatprep.subr.mxu0 0.0
    %58 = vmatpush1.xpose.msra.mxu0 0.0
    %59 = vmatprep.subr.mxu0 0.0
    %60 = vmatpush1.xpose.msra.mxu0 0.0
    %61 = vmatprep.subr.mxu0 0.0
    %62 = vmatpush1.xpose.msra.mxu0 0.0
    %63 = vmatprep.subr.mxu0 0.0
    %64 = vmatpush1.xpose.msra.mxu0 0.0
    %65 = vmatprep.subr.mxu0 0.0
    %66 = vmatpush1.xpose.msra.mxu0 0.0
    %67 = vmatprep.subr.mxu0 0.0
    %68 = vmatpush1.xpose.msra.mxu0 0.0
    %69 = vmatprep.subr.mxu0 0.0
    %70 = vmatpush1.xpose.msra.mxu0 0.0
    %71 = vmatprep.subr.mxu0 0.0
    %72 = vmatpush1.xpose.msra.mxu0 0.0
    %73 = vmatprep.subr.mxu0 0.0
    %74 = vmatpush1.xpose.msra.mxu0 0.0
    %75 = vmatprep.subr.mxu0 0.0
    %76 = vmatpush1.xpose.msra.mxu0 0.0
    %77 = vmatprep.subr.mxu0 0.0
    %78 = vmatpush1.xpose.msra.mxu0 0.0
    %79 = vmatprep.subr.mxu0 0.0
    %80 = vmatpush1.xpose.msra.mxu0 0.0
    %81 = vmatprep.subr.mxu0 0.0
    %82 = vmatpush1.xpose.msra.mxu0 0.0
    %83 = vmatprep.subr.mxu0 0.0
    %84 = vmatpush1.xpose.msra.mxu0 0.0
    %85 = vmatprep.subr.mxu0 0.0
    %86 = vmatpush1.xpose.msra.mxu0 0.0
    %87 = vmatprep.subr.mxu0 0.0
    %88 = vmatpush1.xpose.msra.mxu0 0.0
    %89 = vmatprep.mubr.f32.mxu0 0.0
    %90 = vmatmul.mubr.f32.gmra.mrb[0].mxu0 %v23
    %v91 = vpop.f32.mrb[0].mxu0
    %v92 = vadd.f32 0.0, %v91
    %v93 = vpop.f32.mrb[0].mxu0
    %94 = vdwg.mxu0
    %v95 = vld [vmem:[%s2] sm:$0xff]
    %v96 = vld [vmem:[%s2 + $0x8] sm:$0xff]
    %v97 = vld [vmem:[%s2 + $0x10] sm:$0xff]
    %v98 = vld [vmem:[%s2 + $0x18] sm:$0xff]
    %v99 = vld [vmem:[%s2 + $0x20] sm:$0xff]
    %v100 = vld [vmem:[%s2 + $0x28] sm:$0xff]
    %v101 = vld [vmem:[%s2 + $0x30] sm:$0xff]
    %v102 = vld [vmem:[%s2 + $0x38] sm:$0xff]
    %v103 = vld [vmem:[%s2 + $0x40] sm:$0xff]
    %v104 = vld [vmem:[%s2 + $0x48] sm:$0xff]
    %v105 = vld [vmem:[%s2 + $0x50] sm:$0xff]
    %v106 = vld [vmem:[%s2 + $0x58] sm:$0xff]
    %v107 = vld [vmem:[%s2 + $0x60] sm:$0xff]
    %v108 = vld [vmem:[%s2 + $0x68] sm:$0xff]
    %v109 = vld [vmem:[%s2 + $0x70] sm:$0xff]
    %v110 = vld [vmem:[%s2 + $0x78] sm:$0xff]
    %vm111 = vcmask 15360
    %v113 = vsel %vm111, %v92, 0
    %v116 = vsel %vm111, %v95, 0
    %v119 = vsel %vm111, %v96, 0
    %v122 = vsel %vm111, %v97, 0
    %v125 = vsel %vm111, %v98, 0
    %v128 = vsel %vm111, %v99, 0
    %v131 = vsel %vm111, %v100, 0
    %v134 = vsel %vm111, %v101, 0
    %v137 = vsel %vm111, %v102, 0
    %v140 = vsel %vm111, %v103, 0
    %v143 = vsel %vm111, %v104, 0
    %v146 = vsel %vm111, %v105, 0
    %v149 = vsel %vm111, %v106, 0
    %v152 = vsel %vm111, %v107, 0
    %v155 = vsel %vm111, %v108, 0
    %v158 = vsel %vm111, %v109, 0
    %v161 = vsel %vm111, %v110, 0
    %163 = vmatprep.subr.mxu0 0.0
    %164 = vmatpush1.xpose.msra.mxu0 %v116
    %165 = vmatprep.subr.mxu0 0.0
    %166 = vmatpush1.xpose.msra.mxu0 %v119
    %167 = vmatprep.subr.mxu0 0.0
    %168 = vmatpush1.xpose.msra.mxu0 %v122
    %169 = vmatprep.subr.mxu0 0.0
    %170 = vmatpush1.xpose.msra.mxu0 %v125
    %171 = vmatprep.subr.mxu0 0.0
    %172 = vmatpush1.xpose.msra.mxu0 %v128
    %173 = vmatprep.subr.mxu0 0.0
    %174 = vmatpush1.xpose.msra.mxu0 %v131
    %175 = vmatprep.subr.mxu0 0.0
    %176 = vmatpush1.xpose.msra.mxu0 %v134
    %177 = vmatprep.subr.mxu0 0.0
    %178 = vmatpush1.xpose.msra.mxu0 %v137
    %179 = vmatprep.subr.mxu0 0.0
    %180 = vmatpush1.xpose.msra.mxu0 %v140
    %181 = vmatprep.subr.mxu0 0.0
    %182 = vmatpush1.xpose.msra.mxu0 %v143
    %183 = vmatprep.subr.mxu0 0.0
    %184 = vmatpush1.xpose.msra.mxu0 %v146
    %185 = vmatprep.subr.mxu0 0.0
    %186 = vmatpush1.xpose.msra.mxu0 %v149
    %187 = vmatprep.subr.mxu0 0.0
    %188 = vmatpush1.xpose.msra.mxu0 %v152
    %189 = vmatprep.subr.mxu0 0.0
    %190 = vmatpush1.xpose.msra.mxu0 %v155
    %191 = vmatprep.subr.mxu0 0.0
    %192 = vmatpush1.xpose.msra.mxu0 %v158
    %193 = vmatprep.subr.mxu0 0.0
    %194 = vmatpush1.xpose.msra.mxu0 %v161
    %195 = vmatprep.subr.mxu0 0.0
    %196 = vmatpush1.xpose.msra.mxu0 0.0
    %197 = vmatprep.subr.mxu0 0.0
    %198 = vmatpush1.xpose.msra.mxu0 0.0
    %199 = vmatprep.subr.mxu0 0.0
    %200 = vmatpush1.xpose.msra.mxu0 0.0
    %201 = vmatprep.subr.mxu0 0.0
    %202 = vmatpush1.xpose.msra.mxu0 0.0
    %203 = vmatprep.subr.mxu0 0.0
    %204 = vmatpush1.xpose.msra.mxu0 0.0
    %205 = vmatprep.subr.mxu0 0.0
    %206 = vmatpush1.xpose.msra.mxu0 0.0
    %207 = vmatprep.subr.mxu0 0.0
    %208 = vmatpush1.xpose.msra.mxu0 0.0
    %209 = vmatprep.subr.mxu0 0.0
    %210 = vmatpush1.xpose.msra.mxu0 0.0
    %211 = vmatprep.subr.mxu0 0.0
    %212 = vmatpush1.xpose.msra.mxu0 0.0
    %213 = vmatprep.subr.mxu0 0.0
    %214 = vmatpush1.xpose.msra.mxu0 0.0
    %215 = vmatprep.subr.mxu0 0.0
    %216 = vmatpush1.xpose.msra.mxu0 0.0
    %217 = vmatprep.subr.mxu0 0.0
    %218 = vmatpush1.xpose.msra.mxu0 0.0
    %219 = vmatprep.subr.mxu0 0.0
    %220 = vmatpush1.xpose.msra.mxu0 0.0
    %221 = vmatprep.subr.mxu0 0.0
    %222 = vmatpush1.xpose.msra.mxu0 0.0
    %223 = vmatprep.subr.mxu0 0.0
    %224 = vmatpush1.xpose.msra.mxu0 0.0
    %225 = vmatprep.subr.mxu0 0.0
    %226 = vmatpush1.xpose.msra.mxu0 0.0
    %227 = vmatprep.mubr.f32.mxu0 0.0
    %228 = vmatmul.mubr.f32.gmra.mrb[0].mxu0 %v113
    %v229 = vpop.f32.mrb[0].mxu0
    %v230 = vadd.f32 0.0, %v229
    %v231 = vpop.f32.mrb[0].mxu0
    %232 = vdwg.mxu0
    %233 = vst [vmem:[#allocation2] sm:$0x1] %v230
    // Predicated region
    $region14: #{tpu_custom_call.1} parent=1 // pred_check
      _
    $region15: #{tpu_custom_call.1} parent=1 // pred_check_branch
      %235 = sbr.rel (0) target = $region17
    $region16: #{tpu_custom_call.1} parent=1 // pred_region
      %s237 = ssub.s32 16, 16
      %238 = vsyncadd [#allocation3], %s237
      %s240 = sshll.u32 [#allocation2], 4
      %s241 = int_to_ptr.vmem [resolvable:$true] %s240
      %243 = dma.vmem_to_hbm [thread:$0]  %s241, 16, %s3, [#allocation3]
    $region17: #{tpu_custom_call.1} parent=1 // pred_fallthru
      _
    // Predicated region
    $region18: #{tpu_custom_call.1} parent=1 // pred_check
      _
    $region19: #{tpu_custom_call.1} parent=1 // pred_check_branch
      %245 = sbr.rel (0) target = $region21
    $region20: #{tpu_custom_call.1} parent=1 // pred_region
      %246 = dma.done [#allocation3], 16
    $region21: #{tpu_custom_call.1} parent=1 // pred_fallthru
      _
    %247 = vsyncpa [#allocation3], 1

</llo_original>
